<compile_context>
chip_gen: v7x
topology: tpu7x:2x2x1
jax: 0.10.0
libtpu: 0.0.40
codegen_flags: <defaults>
</compile_context>

<pallas_src>
import math

import jax
import jax.numpy as jnp
from jax.experimental import pallas as pl
from jax.experimental.pallas import tpu as pltpu

_MIB = 1024 * 1024


def _round_up(x: int, m: int) -> int:
    return (x + m - 1) // m * m


def _choose_tile(dim: int, max_tile: int, multiple: int) -> tuple[int, int]:
    """Even split of `dim` into tiles of at most ~max_tile, tile rounded up to `multiple`.

    Returns (tile, padded_dim) with padded_dim = tile * num_tiles >= dim.
    """
    n_tiles = max(1, -(-dim // max_tile))
    tile = _round_up(-(-dim // n_tiles), multiple)
    return tile, tile * n_tiles


def _vmem_capacity_bytes(default: int = 64 * _MIB) -> int:
    """Best-effort VMEM capacity query; conservative default if unavailable."""
    try:
        return int(getattr(pltpu.get_tpu_info(), "vmem_capacity_bytes", default))
    except Exception:
        return default


def _gated_combine(ha0, hs0, ha1, hs1, *, out_dtype):
    """c[m, n, k] = (ha0+ha1) + (ha0-ha1)*tanh(hs0-hs1), evaluated per (m, n, k).

    ha0, hs0: (M, d) f32   -- 0.5 * (z @ W1[0]),  0.5 * relu(z @ W2[0])
    ha1, hs1: (N, d) f32   -- 0.5 * (u @ W1[1]),  0.5 * relu(u @ W2[1])
    returns : (M, N, d) in out_dtype
    """
    M, d = ha0.shape
    N = ha1.shape[0]
    out_itemsize = jnp.dtype(out_dtype).itemsize
    sub = 16 if out_itemsize == 2 else 8        # sublane multiple for output tile rows

    # --- chunk width along n: smallest nc with (nc*d) % 128 == 0, scaled to ~512 lanes ---
    base_nc = 128 // math.gcd(d, 128)
    if base_nc * d <= 2048:
        nc = base_nc * max(1, 512 // (base_nc * d))
        aligned = True
    else:
        nc = 0                                   # fallback: one chunk spans the whole row
        aligned = False

    # --- generation-aware VMEM budget (v5e/v6e: 128 MiB physical, v7x: 64 MiB) ---
    if _vmem_capacity_bytes() >= 96 * _MIB:
        out_budget, vmem_limit = 8 * _MIB, 64 * _MIB
    else:
        out_budget, vmem_limit = 4 * _MIB, 32 * _MIB

    # --- tile selection under the output-block budget ---
    tm, M_pad = _choose_tile(M, 256, sub)
    if aligned:
        if tm * nc * d * out_itemsize > out_budget:
            tm = max(sub, out_budget // (nc * d * out_itemsize) // sub * sub)
            tm, M_pad = _choose_tile(M, tm, sub)
        cap_n = max(nc, out_budget // (tm * d * out_itemsize) // nc * nc)
        tn, N_pad = _choose_tile(N, cap_n, nc)
    else:
        tn, N_pad = N, N
        if tm * tn * d * out_itemsize > out_budget:
            tm = max(sub, out_budget // (tn * d * out_itemsize) // sub * sub)
            tm, M_pad = _choose_tile(M, tm, sub)
        nc = tn

    gm, gn = M_pad // tm, N_pad // tn

    # --- ensure >= 2 grid blocks when possible so both v7x TensorCores get work ---
    if gm * gn == 1:
        if M > sub:
            tm, M_pad = _choose_tile(M, _round_up(-(-M // 2), sub), sub)
        elif N > nc:
            tn, N_pad = _choose_tile(N, max(nc, _round_up(-(-N // 2), nc)), nc)
        gm, gn = M_pad // tm, N_pad // tn

    L = tn * d          # output-tile lane width (flattened n*d), multiple of 128 (or full dim)
    C = nc * d          # chunk lane width: live f32 temporaries are (tm, C)
    n_chunks = L // C

    # --- pad and lay out operands (all tiny relative to the (M, N, d) output) ---
    if M_pad != M:
        ha0 = jnp.pad(ha0, ((0, M_pad - M), (0, 0)))
        hs0 = jnp.pad(hs0, ((0, M_pad - M), (0, 0)))
    if N_pad != N:
        ha1 = jnp.pad(ha1, ((0, N_pad - N), (0, 0)))
        hs1 = jnp.pad(hs1, ((0, N_pad - N), (0, 0)))
    f32 = jnp.float32
    # temporal side: replicate to one chunk width (lane-dense with period d), j-invariant block
    ha0c = jnp.tile(ha0, (1, nc)).astype(f32)                  # (M_pad, C)
    hs0c = jnp.tile(hs0, (1, nc)).astype(f32)                  # (M_pad, C)
    # spatial side: flatten to a single lane-dense row
    ha1f = ha1.reshape(1, N_pad * d).astype(f32)               # (1, N_pad*d)
    hs1f = hs1.reshape(1, N_pad * d).astype(f32)

    def kernel(ha0_ref, hs0_ref, ha1_ref, hs1_ref, o_ref):
        ha0_t = ha0_ref[...]                                   # (tm, C)
        hs0_t = hs0_ref[...]                                   # (tm, C)
        for c in range(n_chunks):                              # static unroll; bounded temps
            lo = c * C
            ha1_r = ha1_ref[:, lo:lo + C]                      # (1, C), sublane-broadcast below
            hs1_r = hs1_ref[:, lo:lo + C]
            t = jnp.tanh(hs0_t - hs1_r)                        # alpha0 = 0.5*(1 + t)
            out = (ha0_t + ha1_r) + (ha0_t - ha1_r) * t        # == a0*alpha0 + a1*alpha1
            o_ref[:, lo:lo + C] = out.astype(o_ref.dtype)

    cost = pl.CostEstimate(
        flops=5 * M_pad * N_pad * d,
        transcendentals=M_pad * N_pad * d,
        bytes_accessed=(out_itemsize * M_pad * N_pad * d               # dominant: output store
                        + 4 * (2 * M_pad * C + 2 * gm * N_pad * d)),   # small reads
    )

    out_flat = pl.pallas_call(
        kernel,
        out_shape=jax.ShapeDtypeStruct((M_pad, N_pad * d), out_dtype),
        grid_spec=pltpu.PrefetchScalarGridSpec(
            num_scalar_prefetch=0,
            grid=(gm, gn),
            in_specs=[
                pl.BlockSpec((tm, C), lambda i, j: (i, 0)),    # temporal chunk, j-invariant
                pl.BlockSpec((tm, C), lambda i, j: (i, 0)),
                pl.BlockSpec((1, L), lambda i, j: (0, j)),     # spatial row slab for block j
                pl.BlockSpec((1, L), lambda i, j: (0, j)),
            ],
            out_specs=pl.BlockSpec((tm, L), lambda i, j: (i, j)),
        ),
        compiler_params=pltpu.CompilerParams(
            dimension_semantics=("parallel", "parallel"),
            vmem_limit_bytes=vmem_limit,
        ),
        cost_estimate=cost,
    )(ha0c, hs0c, ha1f, hs1f)

    return out_flat[:M, :N * d].reshape(M, N, d)


def spatial_temporal_embedding(z_inputs, z_targets, u, W1, W2):
    """Forward pass of SpatialTemporalEmbedding (noGC=False).

    z_inputs : (B, P, d_model)
    z_targets: (B, Q, d_model)
    u        : (N, d_model)
    W1, W2   : (2, d_model, d_model)   (Gated_Dynamic_Connection.Weight1 / Weight2)
    returns  : c_inputs (B, P, N, d_model), c_targets (B, Q, N, d_model)
    """
    B, P, d = z_inputs.shape
    N = u.shape[0]
    hi = jax.lax.Precision.HIGHEST
    f32 = jnp.float32

    # Hoisted per-gate projections (tiny vs. the (M,N,d) combine), HIGHEST MXU precision.
    # 0.5-scaling folds the 2-gate softmax into a single tanh per output element.
    ha1 = (0.5 * jnp.dot(u, W1[1], precision=hi)).astype(f32)
    hs1 = (0.5 * jax.nn.relu(jnp.dot(u, W2[1], precision=hi))).astype(f32)

    def one(z):
        T = z.shape[1]
        z2 = z.reshape(B * T, d)
        ha0 = (0.5 * jnp.dot(z2, W1[0], precision=hi)).astype(f32)
        hs0 = (0.5 * jax.nn.relu(jnp.dot(z2, W2[0], precision=hi))).astype(f32)
        c = _gated_combine(ha0, hs0, ha1, hs1, out_dtype=z.dtype)
        return c.reshape(B, T, N, d)

    return one(z_inputs), one(z_targets)


def _reference(z, u, W1, W2):
    """Direct JAX translation of the PyTorch module (stack / matmul / relu / softmax)."""
    B, T, d = z.shape
    N = u.shape[0]
    x0 = jnp.broadcast_to(z[:, :, None, :], (B, T, N, d))
    x1 = jnp.broadcast_to(u[None, None, :, :], (B, T, N, d))
    data = jnp.stack([x0, x1], axis=3)                                        # (B, T, N, 2, d)
    hi = jax.lax.Precision.HIGHEST
    a = jnp.einsum('btngk,gkj->btngj', data, W1, precision=hi)                # data_out
    s = jnp.maximum(jnp.einsum('btngk,gkj->btngj', data, W2, precision=hi), 0.0)
    s = s - jnp.max(s, axis=3, keepdims=True)                                 # nonan_softmax
    e = jnp.exp(s)
    alpha = e / jnp.sum(e, axis=3, keepdims=True)
    return jnp.sum(a * alpha, axis=3)                                         # (B, T, N, d)


if __name__ == "__main__":
    # Small shapes consistent with the module: z_inputs (B, P, d), z_targets (B, Q, d), u (N, d).
    B, P, Q, N, d_model = 2, 8, 6, 16, 32

    key = jax.random.PRNGKey(0)
    kz, kt, ku, k1, k2 = jax.random.split(key, 5)
    z_inputs = jax.random.normal(kz, (B, P, d_model), jnp.float32)
    z_targets = jax.random.normal(kt, (B, Q, d_model), jnp.float32)
    u = jax.random.normal(ku, (N, d_model), jnp.float32)
    # xavier_normal_-like init for the (num_gate=2, d_k, d_model) gate weights.
    std = math.sqrt(2.0 / (d_model + d_model))
    W1 = std * jax.random.normal(k1, (2, d_model, d_model), jnp.float32)
    W2 = std * jax.random.normal(k2, (2, d_model, d_model), jnp.float32)

    c_inputs, c_targets = spatial_temporal_embedding(z_inputs, z_targets, u, W1, W2)
    jax.block_until_ready((c_inputs, c_targets))

    ref_inputs = _reference(z_inputs, u, W1, W2)
    ref_targets = _reference(z_targets, u, W1, W2)

    assert c_inputs.shape == (B, P, N, d_model)
    assert c_targets.shape == (B, Q, N, d_model)
    assert jnp.allclose(c_inputs, ref_inputs, atol=1e-4, rtol=1e-3)
    assert jnp.allclose(c_targets, ref_targets, atol=1e-4, rtol=1e-3)

    print("KERNEL_OK")
</pallas_src>

<mosaic_0001>
module attributes {stable_mosaic.version = 11 : i64} {
  func.func @kernel(%arg0: i32, %arg1: i32, %arg2: memref<8x512xf32, #tpu.memory_space<vmem>>, %arg3: memref<8x512xf32, #tpu.memory_space<vmem>>, %arg4: memref<1x512xf32, #tpu.memory_space<vmem>>, %arg5: memref<1x512xf32, #tpu.memory_space<vmem>>, %arg6: memref<8x512xf32, #tpu.memory_space<vmem>>) attributes {dimension_semantics = [#tpu.dimension_semantics<parallel>, #tpu.dimension_semantics<parallel>], iteration_bounds = array<i64: 2, 1>, scalar_prefetch = 0 : i64, scratch_operands = 0 : i64, tpu.core_type = #tpu.core_type<tc>, window_params = [{transform_indices = @transform_0, window_bounds = array<i64: 8, 512>}, {transform_indices = @transform_1, window_bounds = array<i64: 8, 512>}, {transform_indices = @transform_2, window_bounds = array<i64: 1, 512>}, {transform_indices = @transform_3, window_bounds = array<i64: 1, 512>}, {transform_indices = @transform_4, window_bounds = array<i64: 8, 512>}]} {
    %c0 = arith.constant 0 : index
    %c0_0 = arith.constant 0 : index
    %0 = vector.load %arg2[%c0, %c0_0] : memref<8x512xf32, #tpu.memory_space<vmem>>, vector<8x512xf32>
    %c0_1 = arith.constant 0 : index
    %c0_2 = arith.constant 0 : index
    %1 = vector.load %arg3[%c0_1, %c0_2] : memref<8x512xf32, #tpu.memory_space<vmem>>, vector<8x512xf32>
    %c0_3 = arith.constant 0 : index
    %c0_4 = arith.constant 0 : index
    %2 = vector.load %arg4[%c0_3, %c0_4] : memref<1x512xf32, #tpu.memory_space<vmem>>, vector<1x512xf32>
    %c0_5 = arith.constant 0 : index
    %c0_6 = arith.constant 0 : index
    %3 = vector.load %arg5[%c0_5, %c0_6] : memref<1x512xf32, #tpu.memory_space<vmem>>, vector<1x512xf32>
    %4 = vector.broadcast %3 : vector<1x512xf32> to vector<8x512xf32>
    %5 = arith.subf %1, %4 : vector<8x512xf32>
    %6 = math.tanh %5 : vector<8x512xf32>
    %7 = vector.broadcast %2 : vector<1x512xf32> to vector<8x512xf32>
    %8 = arith.addf %0, %7 : vector<8x512xf32>
    %9 = vector.broadcast %2 : vector<1x512xf32> to vector<8x512xf32>
    %10 = arith.subf %0, %9 : vector<8x512xf32>
    %11 = arith.mulf %10, %6 : vector<8x512xf32>
    %12 = arith.addf %8, %11 : vector<8x512xf32>
    %c0_7 = arith.constant 0 : index
    %c0_8 = arith.constant 0 : index
    %13 = vector.load %arg6[%c0_7, %c0_8] : memref<8x512xf32, #tpu.memory_space<vmem>>, vector<8x512xf32>
    tpu.vector_store %arg6[%c0_7, %c0_8], %12 {strides = array<i32>} : memref<8x512xf32, #tpu.memory_space<vmem>>, vector<8x512xf32>,
    return
  }
  func.func @transform_0(%arg0: i32, %arg1: i32) -> (i32, i32) {
    %c0_i32 = arith.constant 0 : i32
    %c0_i32_0 = arith.constant 0 : i32
    return %arg0, %c0_i32 : i32, i32
  }
  func.func @transform_1(%arg0: i32, %arg1: i32) -> (i32, i32) {
    %c0_i32 = arith.constant 0 : i32
    %c0_i32_0 = arith.constant 0 : i32
    return %arg0, %c0_i32 : i32, i32
  }
  func.func @transform_2(%arg0: i32, %arg1: i32) -> (i32, i32) {
    %c0_i32 = arith.constant 0 : i32
    %c0_i32_0 = arith.constant 0 : i32
    return %c0_i32, %arg1 : i32, i32
  }
  func.func @transform_3(%arg0: i32, %arg1: i32) -> (i32, i32) {
    %c0_i32 = arith.constant 0 : i32
    %c0_i32_0 = arith.constant 0 : i32
    return %c0_i32, %arg1 : i32, i32
  }
  func.func @transform_4(%arg0: i32, %arg1: i32) -> (i32, i32) {
    %c0_i32 = arith.constant 0 : i32
    return %arg0, %arg1 : i32, i32
  }
}

</mosaic_0001>

<llo_original>
// kernel: tpu_custom_call.1
$region0: #{tpu_custom_call.1}
  #allocation0 [shape = 'u32[]', space=smem, size = 0x4, offset = 0x4, fixed_abs, tag = 'smem constant byte address 0x4 - core index']
  #allocation1 [shape = 'u32[144,128]{1,0:T(1,128)}', space=vmem, size = 0x12000, scoped, tag = 'internal scratch']
  %s0 = inlined_call_operand.hbm [shape: f32[16,512], index: 0, kind: input, shape index: {}]
  %s1 = inlined_call_operand.hbm [shape: f32[16,512], index: 1, kind: input, shape index: {}]
  %s2 = inlined_call_operand.vmem [shape: f32[1,512], index: 2, kind: input, shape index: {}]
  %s3 = inlined_call_operand.vmem [shape: f32[1,512], index: 3, kind: input, shape index: {}]
  %s4 = inlined_call_operand.hbm [shape: f32[16,512], index: 4, kind: output, shape index: {}]
  %s5 = sld [smem:[#allocation0]]
  $region57: #{tpu_custom_call.1} parent=0
    _
  %s7 = ssub.s32 1, %s5
  %s8 = scalar_select 0, %s7, %s5
  $region1: #{tpu_custom_call.1} parent=0
    #allocation2 [shape = 'u8[32768]{0}', space=vmem, size = 0x8000, scoped, tag = 'input window, operand 0']
    #allocation3 [shape = 's32[2]{0}', space=sflag, size = 0x8, scoped, tag = 'scoped memory for tpu_custom_call.1']
    #allocation4 [shape = 's32[2]{0}', space=sflag, size = 0x8, scoped, tag = 'scoped memory for tpu_custom_call.1']
    #allocation5 [shape = 'u8[32768]{0}', space=vmem, size = 0x8000, scoped, tag = 'input window, operand 1']
    #allocation6 [shape = 's32[2]{0}', space=sflag, size = 0x8, scoped, tag = 'scoped memory for tpu_custom_call.1']
    #allocation7 [shape = 'u8[32768]{0}', space=vmem, size = 0x8000, scoped, tag = 'output window, operand 0']
    %9 = vsyncpa [#allocation3], 0
    %s10 = scalar_lea.sflag [#allocation3], 1
    %11 = vsyncpa %s10, 0
    %12 = vsyncpa [#allocation6], 0
    %s13 = scalar_lea.sflag [#allocation6], 1
    %14 = vsyncpa %s13, 0
    %15 = vsyncpa [#allocation4], 0
    %s16 = scalar_lea.sflag [#allocation4], 1
    %17 = vsyncpa %s16, 0
    loop: start=0, step=1, limit=4
    $region2: #{tpu_custom_call.1} parent=1 // loop_pre_header
      _
    $region3: #{tpu_custom_call.1} parent=1 // loop_header
      %s19 = sphi 0, %s23
      %p20 = scmp.ge.s32.totalorder %s19, 4
      %s26 = sphi 0, %s38
      %s27 = sphi 0, %s34
      %s28 = sphi 0, %s26
      %s29 = sphi 0, %s27
      %s30 = sphi 0, %s28
      %s31 = sphi 0, %s29
      %s41 = sphi 0, %s43
      %s44 = sphi 0, %s41
      %s45 = sphi 0, %s44
      %s61 = sphi 0, %s45
      %s67 = sphi 0, %s69
      %s70 = sphi 0, %s67
      %s71 = sphi 0, %s70
      %s87 = sphi 0, %s71
      %s93 = sphi 0, %s95
      %s96 = sphi 0, %s93
      %s97 = sphi 0, %s96
      %s113 = sphi 0, %s97
      %s119 = sphi 0, %s121
      %s122 = sphi 0, %s119
      %s123 = sphi 0, %s122
      %s139 = sphi 0, %s123
      %s147 = sphi 0, %s149
      %s150 = sphi 0, %s147
      %s151 = sphi 0, %s150
      %s167 = sphi 0, %s151
    $region4: #{tpu_custom_call.1} parent=1 // loop_header_branch
      %22 = sbr.rel (%p20) target = $region8
    $region5: #{tpu_custom_call.1} parent=1 // loop_body
      %s24 = ssub.s32 %s19, 1
      %s25 = ssub.s32 %s19, 2
      %s32 = sadd.s32 1, %s27
      %p33 = scmp.ge.s32.totalorder %s32, 1
      %s34 = scalar_select %p33, 0, %s32
      %s35 = sadd.s32 1, %s26
      %s36 = scalar_select %p33, %s35, %s26
      %p37 = scmp.ge.s32.totalorder %s36, 2
      %s38 = scalar_select %p37, 0, %s36
      %s39 = ssub.s32 %s26, %s38
      %p40 = scmp.eq.s32.totalorder %s39, 0
      %s42 = sadd.s32 %s41, 1
      %s43 = scalar_select %p40, %s41, %s42
      %p46 = pneg %p40
      %p47 = scmp.eq.s32.totalorder %s19, 1
      %p48 = por %p46, %p47
      %p49 = scmp.ne.s32.totalorder %s41, %s44
      %p50 = scmp.eq.s32.totalorder %s19, 0
      %p51 = por %p49, %p50
      %p52 = scmp.ne.s32.totalorder %s41, %s44
      %p53 = scmp.eq.s32.totalorder %s24, 1
      %p54 = por %p52, %p53
      %p55 = scmp.ne.s32.totalorder %s44, %s45
      %p56 = scmp.eq.s32.totalorder %s24, 0
      %p57 = por %p55, %p56
      %p58 = scmp.ne.s32.totalorder %s44, %s45
      %p59 = scmp.eq.s32.totalorder %s25, 1
      %p60 = por %p58, %p59
      %p62 = scmp.ne.s32.totalorder %s45, %s61
      %p63 = scmp.eq.s32.totalorder %s25, 0
      %p64 = por %p62, %p63
      %s65 = ssub.s32 %s26, %s38
      %p66 = scmp.eq.s32.totalorder %s65, 0
      %s68 = sadd.s32 %s67, 1
      %s69 = scalar_select %p66, %s67, %s68
      %p72 = pneg %p66
      %p73 = scmp.eq.s32.totalorder %s19, 1
      %p74 = por %p72, %p73
      %p75 = scmp.ne.s32.totalorder %s67, %s70
      %p76 = scmp.eq.s32.totalorder %s19, 0
      %p77 = por %p75, %p76
      %p78 = scmp.ne.s32.totalorder %s67, %s70
      %p79 = scmp.eq.s32.totalorder %s24, 1
      %p80 = por %p78, %p79
      %p81 = scmp.ne.s32.totalorder %s70, %s71
      %p82 = scmp.eq.s32.totalorder %s24, 0
      %p83 = por %p81, %p82
      %p84 = scmp.ne.s32.totalorder %s70, %s71
      %p85 = scmp.eq.s32.totalorder %s25, 1
      %p86 = por %p84, %p85
      %p88 = scmp.ne.s32.totalorder %s71, %s87
      %p89 = scmp.eq.s32.totalorder %s25, 0
      %p90 = por %p88, %p89
      %s91 = ssub.s32 %s27, %s34
      %p92 = scmp.eq.s32.totalorder %s91, 0
      %s94 = sadd.s32 %s93, 1
      %s95 = scalar_select %p92, %s93, %s94
      %p98 = pneg %p92
      %p99 = scmp.eq.s32.totalorder %s19, 1
      %p100 = por %p98, %p99
      %p101 = scmp.ne.s32.totalorder %s93, %s96
      %p102 = scmp.eq.s32.totalorder %s19, 0
      %p103 = por %p101, %p102
      %p104 = scmp.ne.s32.totalorder %s93, %s96
      %p105 = scmp.eq.s32.totalorder %s24, 1
      %p106 = por %p104, %p105
      %p107 = scmp.ne.s32.totalorder %s96, %s97
      %p108 = scmp.eq.s32.totalorder %s24, 0
      %p109 = por %p107, %p108
      %p110 = scmp.ne.s32.totalorder %s96, %s97
      %p111 = scmp.eq.s32.totalorder %s25, 1
      %p112 = por %p110, %p111
      %p114 = scmp.ne.s32.totalorder %s97, %s113
      %p115 = scmp.eq.s32.totalorder %s25, 0
      %p116 = por %p114, %p115
      %s117 = ssub.s32 %s27, %s34
      %p118 = scmp.eq.s32.totalorder %s117, 0
      %s120 = sadd.s32 %s119, 1
      %s121 = scalar_select %p118, %s119, %s120
      %p124 = pneg %p118
      %p125 = scmp.eq.s32.totalorder %s19, 1
      %p126 = por %p124, %p125
      %p127 = scmp.ne.s32.totalorder %s119, %s122
      %p128 = scmp.eq.s32.totalorder %s19, 0
      %p129 = por %p127, %p128
      %p130 = scmp.ne.s32.totalorder %s119, %s122
      %p131 = scmp.eq.s32.totalorder %s24, 1
      %p132 = por %p130, %p131
      %p133 = scmp.ne.s32.totalorder %s122, %s123
      %p134 = scmp.eq.s32.totalorder %s24, 0
      %p135 = por %p133, %p134
      %p136 = scmp.ne.s32.totalorder %s122, %s123
      %p137 = scmp.eq.s32.totalorder %s25, 1
      %p138 = por %p136, %p137
      %p140 = scmp.ne.s32.totalorder %s123, %s139
      %p141 = scmp.eq.s32.totalorder %s25, 0
      %p142 = por %p140, %p141
      %s143 = ssub.s32 %s26, %s38
      %s144 = ssub.s32 %s27, %s34
      %s145 = sor.u32 %s143, %s144
      %p146 = scmp.eq.s32.totalorder %s145, 0
      %s148 = sadd.s32 %s147, 1
      %s149 = scalar_select %p146, %s147, %s148
      %p152 = pneg %p146
      %p153 = scmp.eq.s32.totalorder %s19, 1
      %p154 = por %p152, %p153
      %p155 = scmp.ne.s32.totalorder %s147, %s150
      %p156 = scmp.eq.s32.totalorder %s19, 0
      %p157 = por %p155, %p156
      %p158 = scmp.ne.s32.totalorder %s147, %s150
      %p159 = scmp.eq.s32.totalorder %s24, 1
      %p160 = por %p158, %p159
      %p161 = scmp.ne.s32.totalorder %s150, %s151
      %p162 = scmp.eq.s32.totalorder %s24, 0
      %p163 = por %p161, %p162
      %p164 = scmp.ne.s32.totalorder %s150, %s151
      %p165 = scmp.eq.s32.totalorder %s25, 1
      %p166 = por %p164, %p165
      %p168 = scmp.ne.s32.totalorder %s151, %s167
      %p169 = scmp.eq.s32.totalorder %s25, 0
      %p170 = por %p168, %p169
      %p171 = scmp.le.s32.totalorder 1, %s19
      %p172 = scmp.lt.s32.totalorder %s19, 3
      %p173 = pnand %p171, %p172
      %p174 = pneg %p173
      // Predicated region
      $region9: #{tpu_custom_call.1} parent=5 // pred_check
        _
      $region10: #{tpu_custom_call.1} parent=5 // pred_check_branch
        %176 = sbr.rel (%p173) target = $region12
      $region11: #{tpu_custom_call.1} parent=5 // pred_region
        %s177 = ssub.s32 %s19, 1
        // Predicated region
        $region13: #{tpu_custom_call.1} parent=11 // pred_check
          %p178 = pneg %p109
        $region14: #{tpu_custom_call.1} parent=11 // pred_check_branch
          %180 = sbr.rel (%p178) target = $region16
        $region15: #{tpu_custom_call.1} parent=11 // pred_region
          %s181 = smul.u32 4, %s29
          %p182 = scmp.lt.s32.totalorder %s181, 3
          %s183 = scalar_select %p182, %s181, 3
          %s184 = scalar_lea.vmem %s2, %s183
          %s185 = smul.u32 4, %s29
        $region16: #{tpu_custom_call.1} parent=11 // pred_fallthru
          _
        // Predicated region
        $region17: #{tpu_custom_call.1} parent=11 // pred_check
          %p186 = pneg %p135
        $region18: #{tpu_custom_call.1} parent=11 // pred_check_branch
          %188 = sbr.rel (%p186) target = $region20
        $region19: #{tpu_custom_call.1} parent=11 // pred_region
          %s189 = smul.u32 4, %s29
          %p190 = scmp.lt.s32.totalorder %s189, 3
          %s191 = scalar_select %p190, %s189, 3
          %s192 = scalar_lea.vmem %s3, %s191
          %s193 = smul.u32 4, %s29
        $region20: #{tpu_custom_call.1} parent=11 // pred_fallthru
          _
      $region12: #{tpu_custom_call.1} parent=5 // pred_fallthru
        _
      %p194 = scmp.lt.s32.totalorder %s19, 2
      // Predicated region
      $region21: #{tpu_custom_call.1} parent=5 // pred_check
        %p195 = pneg %p194
      $region22: #{tpu_custom_call.1} parent=5 // pred_check_branch
        %197 = sbr.rel (%p195) target = $region24
      $region23: #{tpu_custom_call.1} parent=5 // pred_region
        // Predicated region
        $region25: #{tpu_custom_call.1} parent=23 // pred_check
          %p198 = pneg %p51
        $region26: #{tpu_custom_call.1} parent=23 // pred_check_branch
          %200 = sbr.rel (%p198) target = $region28
        $region27: #{tpu_custom_call.1} parent=23 // pred_region
          %s201 = sand.u32 %s41, 1
          %s202 = scalar_lea.sflag [#allocation3], %s201
          %s203 = sand.u32 %s41, 1
          %s204 = smul.addr %s203, 32
          %s205 = scalar_lea.vmem [#allocation2], %s204
          %s207 = ssub.s32 512, 512
          %208 = vsyncadd %s202, %s207
          %s209 = smul.addr %s26, 4
          %s210 = smul.addr %s209, 128
          %s211 = scalar_lea.hbm %s0, %s210
          %s213 = sshll.u32 %s205, 4
          %s214 = int_to_ptr.vmem [resolvable:$true] %s213
          %216 = dma.hbm_to_vmem [thread:$0]  %s211, 512, %s214, %s202
        $region28: #{tpu_custom_call.1} parent=23 // pred_fallthru
          _
        // Predicated region
        $region29: #{tpu_custom_call.1} parent=23 // pred_check
          %p217 = pneg %p77
        $region30: #{tpu_custom_call.1} parent=23 // pred_check_branch
          %219 = sbr.rel (%p217) target = $region32
        $region31: #{tpu_custom_call.1} parent=23 // pred_region
          %s220 = sand.u32 %s67, 1
          %s221 = scalar_lea.sflag [#allocation6], %s220
          %s222 = sand.u32 %s67, 1
          %s223 = smul.addr %s222, 32
          %s224 = scalar_lea.vmem [#allocation5], %s223
          %s226 = ssub.s32 512, 512
          %227 = vsyncadd %s221, %s226
          %s228 = smul.addr %s26, 4
          %s229 = smul.addr %s228, 128
          %s230 = scalar_lea.hbm %s1, %s229
          %s232 = sshll.u32 %s224, 4
          %s233 = int_to_ptr.vmem [resolvable:$true] %s232
          %235 = dma.hbm_to_vmem [thread:$0]  %s230, 512, %s233, %s221
        $region32: #{tpu_custom_call.1} parent=23 // pred_fallthru
          _
      $region24: #{tpu_custom_call.1} parent=5 // pred_fallthru
        _
      %p236 = scmp.le.s32.totalorder 1, %s19
      %p237 = scmp.lt.s32.totalorder %s19, 3
      %p238 = pnand %p236, %p237
      %p239 = pneg %p238
      // Predicated region
      $region33: #{tpu_custom_call.1} parent=5 // pred_check
        _
      $region34: #{tpu_custom_call.1} parent=5 // pred_check_branch
        %241 = sbr.rel (%p238) target = $region36
      $region35: #{tpu_custom_call.1} parent=5 // pred_region
        %s242 = ssub.s32 %s19, 1
        %s243 = sand.u32 %s44, 1
        %s244 = scalar_lea.sflag [#allocation3], %s243
        %s245 = sand.u32 %s44, 1
        %s246 = smul.addr %s245, 32
        %s247 = scalar_lea.vmem [#allocation2], %s246
        // Predicated region
        $region37: #{tpu_custom_call.1} parent=35 // pred_check
          %p248 = pneg %p57
        $region38: #{tpu_custom_call.1} parent=35 // pred_check_branch
          %250 = sbr.rel (%p248) target = $region40
        $region39: #{tpu_custom_call.1} parent=35 // pred_region
          %251 = dma.done %s244, 512
        $region40: #{tpu_custom_call.1} parent=35 // pred_fallthru
          _
        %s252 = sand.u32 %s70, 1
        %s253 = scalar_lea.sflag [#allocation6], %s252
        %s254 = sand.u32 %s70, 1
        %s255 = smul.addr %s254, 32
        %s256 = scalar_lea.vmem [#allocation5], %s255
        // Predicated region
        $region41: #{tpu_custom_call.1} parent=35 // pred_check
          %p257 = pneg %p83
        $region42: #{tpu_custom_call.1} parent=35 // pred_check_branch
          %259 = sbr.rel (%p257) target = $region44
        $region43: #{tpu_custom_call.1} parent=35 // pred_region
          %260 = dma.done %s253, 512
        $region44: #{tpu_custom_call.1} parent=35 // pred_fallthru
          _
        %s261 = sand.u32 %s44, 1
        %s262 = scalar_lea.sflag [#allocation3], %s261
        %s263 = sand.u32 %s44, 1
        %s264 = smul.addr %s263, 32
        %s265 = scalar_lea.vmem [#allocation2], %s264
        %p266 = pneg %p57
        %p267 = pneg %p54
        %s268 = sand.u32 %s70, 1
        %s269 = scalar_lea.sflag [#allocation6], %s268
        %s270 = sand.u32 %s70, 1
        %s271 = smul.addr %s270, 32
        %s272 = scalar_lea.vmem [#allocation5], %s271
        %p273 = pneg %p83
        %p274 = pneg %p80
        %s275 = smul.u32 4, %s29
        %p276 = scmp.lt.s32.totalorder %s275, 3
        %s277 = scalar_select %p276, %s275, 3
        %s278 = scalar_lea.vmem %s2, %s277
        %p279 = pneg %p109
        %p280 = pneg %p106
        %s281 = smul.u32 4, %s29
        %p282 = scmp.lt.s32.totalorder %s281, 3
        %s283 = scalar_select %p282, %s281, 3
        %s284 = scalar_lea.vmem %s3, %s283
        %p285 = pneg %p135
        %p286 = pneg %p132
        %p287 = pneg %p163
        %p288 = pneg %p160
        %s289 = sand.u32 %s150, 1
        %s290 = scalar_lea.sflag [#allocation4], %s289
        %s291 = sand.u32 %s150, 1
        %s292 = smul.addr %s291, 32
        %s293 = scalar_lea.vmem [#allocation7], %s292
        %s294 = smul.u32 4, %s29
        %p295 = scmp.lt.s32.totalorder %s294, 3
        %s296 = scalar_select %p295, %s294, 3
        %s297 = scalar_lea.vmem %s2, %s296
        %s298 = smul.u32 4, %s29
        %s299 = smul.u32 4, %s29
        %p300 = scmp.lt.s32.totalorder %s299, 3
        %s301 = scalar_select %p300, %s299, 3
        %s302 = scalar_lea.vmem %s3, %s301
        %s303 = smul.u32 4, %s29
        %s304 = smul.u32 4, %s29
        %v305 = vld [vmem:[%s247] sm:$0xff]
        %v306 = vld [vmem:[%s247 + $0x8] sm:$0xff]
        %v307 = vld [vmem:[%s247 + $0x10] sm:$0xff]
        %v308 = vld [vmem:[%s247 + $0x18] sm:$0xff]
        %v309 = vld [vmem:[%s256] sm:$0xff]
        %v310 = vld [vmem:[%s256 + $0x8] sm:$0xff]
        %v311 = vld [vmem:[%s256 + $0x10] sm:$0xff]
        %v312 = vld [vmem:[%s256 + $0x18] sm:$0xff]
        %v313 = vld [vmem:[%s297] sm:$0xf]
        %v314 = vld [vmem:[%s302] sm:$0xf]
        %v316 = vlaneseq
        %v317 = vshrl.u32 %v316, 7
        %v318 = vsub.s32 0, %v317
        %v319 = vrot.slane %v314, %v318
        %v320 = vlaneseq
        %v321 = vshrl.u32 %v320, 7
        %v322 = vsub.s32 1, %v321
        %v323 = vrot.slane %v314, %v322
        %v324 = vlaneseq
        %v325 = vshrl.u32 %v324, 7
        %v326 = vsub.s32 2, %v325
        %v327 = vrot.slane %v314, %v326
        %v328 = vlaneseq
        %v329 = vshrl.u32 %v328, 7
        %v330 = vsub.s32 3, %v329
        %v331 = vrot.slane %v314, %v330
        %v336 = vsub.f32 %v309, %v319
        %v337 = vsub.f32 %v310, %v323
        %v338 = vsub.f32 %v311, %v327
        %v339 = vsub.f32 %v312, %v331
        %v340 = vtanh.pop %v336
        %v341 = vtanh.pop %v337
        %v342 = vtanh.pop %v338
        %v343 = vtanh.pop %v339
        %v345 = vlaneseq
        %v346 = vshrl.u32 %v345, 7
        %v347 = vsub.s32 0, %v346
        %v348 = vrot.slane %v313, %v347
        %v349 = vlaneseq
        %v350 = vshrl.u32 %v349, 7
        %v351 = vsub.s32 1, %v350
        %v352 = vrot.slane %v313, %v351
        %v353 = vlaneseq
        %v354 = vshrl.u32 %v353, 7
        %v355 = vsub.s32 2, %v354
        %v356 = vrot.slane %v313, %v355
        %v357 = vlaneseq
        %v358 = vshrl.u32 %v357, 7
        %v359 = vsub.s32 3, %v358
        %v360 = vrot.slane %v313, %v359
        %v365 = vadd.f32 %v305, %v348
        %v366 = vadd.f32 %v306, %v352
        %v367 = vadd.f32 %v307, %v356
        %v368 = vadd.f32 %v308, %v360
        %v369 = vsub.f32 %v305, %v348
        %v370 = vsub.f32 %v306, %v352
        %v371 = vsub.f32 %v307, %v356
        %v372 = vsub.f32 %v308, %v360
        %v373 = vmul.f32 %v369, %v340
        %v374 = vmul.f32 %v370, %v341
        %v375 = vmul.f32 %v371, %v342
        %v376 = vmul.f32 %v372, %v343
        %v377 = vadd.f32 %v365, %v373
        %v378 = vadd.f32 %v366, %v374
        %v379 = vadd.f32 %v367, %v375
        %v380 = vadd.f32 %v368, %v376
        %381 = vst [vmem:[%s293] sm:$0xff] %v377
        %382 = vst [vmem:[%s293 + $0x8] sm:$0xff] %v378
        %383 = vst [vmem:[%s293 + $0x10] sm:$0xff] %v379
        %384 = vst [vmem:[%s293 + $0x18] sm:$0xff] %v380
        %s385 = sand.u32 %s150, 1
        %s386 = scalar_lea.sflag [#allocation4], %s385
        %s387 = sand.u32 %s150, 1
        %s388 = smul.addr %s387, 32
        %s389 = scalar_lea.vmem [#allocation7], %s388
        // Predicated region
        $region45: #{tpu_custom_call.1} parent=35 // pred_check
          %p390 = pneg %p160
        $region46: #{tpu_custom_call.1} parent=35 // pred_check_branch
          %392 = sbr.rel (%p390) target = $region48
        $region47: #{tpu_custom_call.1} parent=35 // pred_region
          %s393 = smul.u32 4, %s29
          %s395 = ssub.s32 512, 512
          %396 = vsyncadd %s386, %s395
          %s397 = smul.addr %s28, 4
          %s398 = sadd.s32 %s393, %s397
          %s399 = smul.addr %s398, 128
          %s400 = scalar_lea.hbm %s4, %s399
          %s402 = sshll.u32 %s389, 4
          %s403 = int_to_ptr.vmem [resolvable:$true] %s402
          %405 = dma.vmem_to_hbm [thread:$0]  %s403, 512, %s400, %s386
        $region48: #{tpu_custom_call.1} parent=35 // pred_fallthru
          _
      $region36: #{tpu_custom_call.1} parent=5 // pred_fallthru
        _
      %p406 = scmp.le.s32.totalorder 2, %s19
      // Predicated region
      $region49: #{tpu_custom_call.1} parent=5 // pred_check
        %p407 = pneg %p406
      $region50: #{tpu_custom_call.1} parent=5 // pred_check_branch
        %409 = sbr.rel (%p407) target = $region52
      $region51: #{tpu_custom_call.1} parent=5 // pred_region
        %s410 = ssub.s32 %s19, 2
        // Predicated region
        $region53: #{tpu_custom_call.1} parent=51 // pred_check
          %p411 = pneg %p166
        $region54: #{tpu_custom_call.1} parent=51 // pred_check_branch
          %413 = sbr.rel (%p411) target = $region56
        $region55: #{tpu_custom_call.1} parent=51 // pred_region
          %s414 = sand.u32 %s151, 1
          %s415 = scalar_lea.sflag [#allocation4], %s414
          %s416 = sand.u32 %s151, 1
          %s417 = smul.addr %s416, 32
          %s418 = scalar_lea.vmem [#allocation7], %s417
          %419 = dma.done %s415, 512
        $region56: #{tpu_custom_call.1} parent=51 // pred_fallthru
          _
      $region52: #{tpu_custom_call.1} parent=5 // pred_fallthru
        _
    $region6: #{tpu_custom_call.1} parent=1 // loop_footer
      %s23 = sadd.s32 1, %s19
    $region7: #{tpu_custom_call.1} parent=1 // loop_footer_branch
      %18 = sbr.rel target = $region3
    $region8: #{tpu_custom_call.1} parent=1 // loop_exit
      _
    %420 = vsyncpa [#allocation3], 1
    %s421 = scalar_lea.sflag [#allocation3], 1
    %422 = vsyncpa %s421, 1
    %423 = vsyncpa [#allocation6], 1
    %s424 = scalar_lea.sflag [#allocation6], 1
    %425 = vsyncpa %s424, 1
    %426 = vsyncpa [#allocation4], 1
    %s427 = scalar_lea.sflag [#allocation4], 1
    %428 = vsyncpa %s427, 1

</llo_original>
